<compile_context>
chip_gen: v6e
topology: v6e:2x2x1
jax: 0.10.0
libtpu: 0.0.40
codegen_flags: <defaults>
</compile_context>

<pallas_src>
import functools

import jax
import jax.numpy as jnp
from jax.experimental import pallas as pl
from jax.experimental.pallas import tpu as pltpu


def _deepset_partial_kernel(n_total, tiles_per_core, compute_dtype,
                            x_ref, idx_ref, w1_ref, b1_ref, w2_ref, b2_ref, out_ref):
    """Per-tile: layers 1-2 of local_nn + one-hot segment-sum into a per-core partial."""
    f32 = jnp.float32
    p = pl.program_id(0)          # core-split index ("parallel")
    i = pl.program_id(1)          # tile index within this core's chunk ("arbitrary")

    @pl.when(i == 0)
    def _():
        out_ref[...] = jnp.zeros_like(out_ref)

    tile_n = x_ref.shape[0]
    b = out_ref.shape[1]

    # ---- local_nn layers 1,2 (bf16 MXU operands, f32 accumulation) ----
    xc = x_ref[...].astype(compute_dtype)                                   # [T, C]
    h = jnp.dot(xc, w1_ref[...], preferred_element_type=f32) + b1_ref[...]  # [T, E]
    h = jnp.maximum(h, 0.0)
    h = jnp.dot(h.astype(compute_dtype), w2_ref[...],
                preferred_element_type=f32) + b2_ref[...]                   # [T, E]
    h = jnp.maximum(h, 0.0)

    # ---- mask voters past the end of x (partial / fully OOB tiles) ----
    # Padded rows of the block have unspecified contents; zeroing h here keeps any
    # garbage/NaN (and any stray index match) out of the reduction.
    base = (p * tiles_per_core + i) * tile_n
    pos = base + jax.lax.broadcasted_iota(jnp.int32, (tile_n, 1), 0)        # [T, 1]
    h = jnp.where(pos < n_total, h, 0.0)

    # ---- segment sum via one-hot matmul (natural orientation, f32) ----
    idx = idx_ref[...]                                                      # [1, T] int32
    onehot = (jax.lax.broadcasted_iota(jnp.int32, (b, tile_n), 0)
              == idx).astype(f32)                                           # [B, T]
    out_ref[...] += jnp.dot(onehot, h, preferred_element_type=f32)[None]    # [1, B, E]


def _finalize(seg, cnt, params):
    """Hoisted local layer 3 + global MLP + log_softmax (tiny; plain JAX)."""
    # Layer 3 is affine with no activation, so it commutes with the segment sum:
    #   segsum(h2 @ w3 + b3) = segsum(h2) @ w3 + cnt * b3
    seg = seg @ params["w3"] + cnt[:, None] * params["b3"]
    s = jnp.maximum(seg @ params["g1"] + params["c1"], 0.0)
    s = jnp.maximum(s @ params["g2"] + params["c2"], 0.0)
    scores = s @ params["g3"] + params["c3"]
    return jax.nn.log_softmax(scores, axis=-1)


def deepset_election_forward(x, index, params, num_elections, *,
                             tile_n=8192, compute_dtype=jnp.bfloat16,
                             num_core_splits=2,
                             vmem_limit_bytes=32 * 1024 * 1024):
    """x: [N, C], index: [N] int32 -> log_probs [B, C]."""
    assert tile_n % 128 == 0, "tile_n must be a multiple of 128 (lane width)"
    n, c = x.shape
    e = params["w1"].shape[1]
    b = num_elections
    f32 = jnp.float32

    # Clamp the tile so the sublane block dim never exceeds the array (standard partial-
    # block handling covers the ragged tail).  For n < 128 the single block is padded past
    # the end of x and fully handled by the in-kernel position mask.
    tile_n = max(128, min(tile_n, max(128, (n // 128) * 128)))

    num_tiles = pl.cdiv(n, tile_n)
    tiles_per_core = pl.cdiv(num_tiles, num_core_splits)

    # [N] -> [1, N] view (row-major reshape; no data movement).
    idx2d = index.astype(jnp.int32).reshape(1, n)

    # One-time tiny casts of the two streamed-against weights; biases stay f32.
    w1c = params["w1"].astype(compute_dtype)                    # [C, E]
    w2c = params["w2"].astype(compute_dtype)                    # [E, E]
    b1 = params["b1"].astype(f32).reshape(1, e)
    b2 = params["b2"].astype(f32).reshape(1, e)

    def x_map(p, i):
        # Clamp fully out-of-range logical tiles (only when 2*tiles_per_core > num_tiles);
        # their contribution is zeroed by the in-kernel position mask.
        return (jnp.minimum(p * tiles_per_core + i, num_tiles - 1), 0)

    def idx_map(p, i):
        return (0, jnp.minimum(p * tiles_per_core + i, num_tiles - 1))

    const2 = lambda p, i: (0, 0)    # weights: constant index map -> VMEM resident

    kernel = functools.partial(_deepset_partial_kernel, n, tiles_per_core, compute_dtype)

    flops = int(2 * n * e * (c + e + b))
    bytes_accessed = int(x.size * x.dtype.itemsize + idx2d.size * 4
                         + w1c.size * w1c.dtype.itemsize + w2c.size * w2c.dtype.itemsize
                         + (b1.size + b2.size) * 4 + num_core_splits * b * e * 4)

    partials = pl.pallas_call(
        kernel,
        out_shape=jax.ShapeDtypeStruct((num_core_splits, b, e), f32),
        grid_spec=pltpu.PrefetchScalarGridSpec(
            num_scalar_prefetch=0,
            grid=(num_core_splits, tiles_per_core),
            in_specs=[
                pl.BlockSpec((tile_n, c), x_map),     # x streamed in natural layout
                pl.BlockSpec((1, tile_n), idx_map),   # index tile
                pl.BlockSpec((c, e), const2),         # w1 (compute_dtype)
                pl.BlockSpec((1, e), const2),         # b1
                pl.BlockSpec((e, e), const2),         # w2 (compute_dtype)
                pl.BlockSpec((1, e), const2),         # b2
            ],
            out_specs=pl.BlockSpec((1, b, e), lambda p, i: (p, 0, 0)),  # per-core partial
        ),
        compiler_params=pltpu.CompilerParams(
            dimension_semantics=("parallel", "arbitrary"),
            vmem_limit_bytes=vmem_limit_bytes,
        ),
        cost_estimate=pl.CostEstimate(
            flops=flops, transcendentals=0, bytes_accessed=bytes_accessed),
    )(x, idx2d, w1c, b1, w2c, b2)

    seg = partials.sum(axis=0)                                               # [B, E]
    # Voter counts depend only on `index` (4 B/voter): one tiny pass in the wrapper,
    # needed for the hoisted b3 term.
    cnt = jax.ops.segment_sum(jnp.ones((n,), f32), index, num_segments=b)    # [B]
    return _finalize(seg, cnt, params)


# ----------------------------- references & init ----------------------------------------

def init_params(key, num_candidates, embedding_size, *, global_in_scale=1.0):
    c, e = num_candidates, embedding_size
    ks = jax.random.split(key, 6)

    def lin(kw, fan_in, fan_out):
        w = jax.random.normal(kw, (fan_in, fan_out), jnp.float32) * (1.0 / jnp.sqrt(fan_in))
        bias = jnp.zeros((1, fan_out), jnp.float32)
        return w, bias

    w1, b1 = lin(ks[0], c, e)
    w2, b2 = lin(ks[1], e, e)
    w3, b3 = lin(ks[2], e, e)
    g1, c1 = lin(ks[3], e, e)
    g2, c2 = lin(ks[4], e, e)
    g3, c3 = lin(ks[5], e, c)
    # Optional scale on the global net's first layer: keeps sum-aggregated demo
    # activations O(1) so the numeric tolerance checks below are meaningful.
    g1 = g1 * global_in_scale
    return dict(w1=w1, b1=b1, w2=w2, b2=b2, w3=w3, b3=b3,
                g1=g1, c1=c1, g2=g2, c2=c2, g3=g3, c3=c3)


def reference_forward(x, index, params, num_elections):
    """Pure-f32 JAX reference in the original (un-hoisted) op order."""
    h = jnp.maximum(x @ params["w1"] + params["b1"], 0.0)
    h = jnp.maximum(h @ params["w2"] + params["b2"], 0.0)
    h = h @ params["w3"] + params["b3"]
    seg = jax.ops.segment_sum(h, index, num_segments=num_elections)
    s = jnp.maximum(seg @ params["g1"] + params["c1"], 0.0)
    s = jnp.maximum(s @ params["g2"] + params["c2"], 0.0)
    scores = s @ params["g3"] + params["c3"]
    return jax.nn.log_softmax(scores, axis=-1)


def matched_reference(x, index, params, num_elections, compute_dtype=jnp.bfloat16):
    """JAX reference using the same mixed precision as the kernel (tight check)."""
    f32 = jnp.float32
    h = jnp.dot(x.astype(compute_dtype), params["w1"].astype(compute_dtype),
                preferred_element_type=f32) + params["b1"]
    h = jnp.maximum(h, 0.0)
    h = jnp.dot(h.astype(compute_dtype), params["w2"].astype(compute_dtype),
                preferred_element_type=f32) + params["b2"]
    h = jnp.maximum(h, 0.0)
    seg = jax.ops.segment_sum(h, index, num_segments=num_elections)
    cnt = jax.ops.segment_sum(jnp.ones((x.shape[0],), f32), index, num_segments=num_elections)
    return _finalize(seg, cnt, params)


if __name__ == "__main__":
    num_candidates = 8       # C
    embedding_size = 32      # E
    num_voters = 1000        # N (exercises partial-tail masking)
    num_elections = 3        # B

    key = jax.random.PRNGKey(0)
    k_x, k_i, k_p = jax.random.split(key, 3)

    # Ballots: one score row per voter over the candidates; voter -> election assignment.
    x = jax.random.normal(k_x, (num_voters, num_candidates), jnp.float32)
    index = jax.random.randint(k_i, (num_voters,), 0, num_elections, jnp.int32)
    params = init_params(k_p, num_candidates, embedding_size, global_in_scale=0.01)

    # Run 1: small tile -> grid (2, 4); exercises the core split, multi-step accumulation
    # and the masked partial tail tile (rows 1000..1023 of the last block).
    fwd_small = jax.jit(lambda xx, ii: deepset_election_forward(
        xx, ii, params, num_elections, tile_n=128))
    log_probs = jax.block_until_ready(fwd_small(x, index))

    # Run 2: default (large) tile, clamped to 896 -> grid (2, 1); exercises the other
    # partial-block path (core 1's tile extends past N).
    fwd_big = jax.jit(lambda xx, ii: deepset_election_forward(
        xx, ii, params, num_elections))
    log_probs_big = jax.block_until_ready(fwd_big(x, index))

    matched = matched_reference(x, index, params, num_elections)
    full_f32 = reference_forward(x, index, params, num_elections)

    assert log_probs.shape == (num_elections, num_candidates)
    # Tight check vs a reference using the kernel's mixed precision.
    assert jnp.allclose(log_probs, matched, atol=2e-3, rtol=2e-3), "mismatch vs matched-precision ref"
    assert jnp.allclose(log_probs_big, matched, atol=2e-3, rtol=2e-3), "mismatch vs matched-precision ref (big tile)"
    # Loose check vs the pure-f32 reference (bf16 streaming in layers 1-2 bounds this).
    assert jnp.allclose(log_probs, full_f32, atol=1e-1, rtol=1e-1), "mismatch vs f32 reference"

    # (election() glue: winners one-hot from argmax — plain JAX, not part of the hot path.)
    winners = jax.nn.one_hot(jnp.argmax(log_probs, axis=-1), num_candidates)
    jax.block_until_ready(winners)

    print("KERNEL_OK")
</pallas_src>

<mosaic_0001>
module attributes {stable_mosaic.version = 11 : i64} {
  func.func private @main(%arg0: i32) attributes {dimension_semantics = [#tpu.dimension_semantics<core_parallel>], iteration_bounds = array<i64: 2>, tpu.core_type = #tpu.core_type<sc_scalar_subcore>, window_params = []} {
    return
  }
}

module attributes {stable_mosaic.version = 11 : i64} {
  func.func private @main(%arg0: i32) attributes {dimension_semantics = [#tpu.dimension_semantics<core_parallel>], iteration_bounds = array<i64: 2>, tpu.core_type = #tpu.core_type<sc_scalar_subcore>, window_params = []} {
    return
  }
}

module attributes {stable_mosaic.version = 11 : i64} {
  func.func @_deepset_partial_kernel(%arg0: i32, %arg1: i32, %arg2: memref<128x8xf32, #tpu.memory_space<vmem>>, %arg3: memref<1x128xi32, #tpu.memory_space<vmem>>, %arg4: memref<8x32xbf16, #tpu.memory_space<vmem>>, %arg5: memref<1x32xf32, #tpu.memory_space<vmem>>, %arg6: memref<32x32xbf16, #tpu.memory_space<vmem>>, %arg7: memref<1x32xf32, #tpu.memory_space<vmem>>, %arg8: memref<1x3x32xf32, #tpu.memory_space<vmem>>) attributes {dimension_semantics = [#tpu.dimension_semantics<parallel>, #tpu.dimension_semantics<arbitrary>], iteration_bounds = array<i64: 2, 4>, scalar_prefetch = 0 : i64, scratch_operands = 0 : i64, tpu.core_type = #tpu.core_type<tc>, window_params = [{transform_indices = @transform_0, window_bounds = array<i64: 128, 8>}, {transform_indices = @transform_1, window_bounds = array<i64: 1, 128>}, {pipeline_mode = #tpu.pipeline_mode<synchronous>, transform_indices = @transform_2, window_bounds = array<i64: 8, 32>}, {pipeline_mode = #tpu.pipeline_mode<synchronous>, transform_indices = @transform_3, window_bounds = array<i64: 1, 32>}, {pipeline_mode = #tpu.pipeline_mode<synchronous>, transform_indices = @transform_4, window_bounds = array<i64: 32, 32>}, {pipeline_mode = #tpu.pipeline_mode<synchronous>, transform_indices = @transform_5, window_bounds = array<i64: 1, 32>}, {transform_indices = @transform_6, window_bounds = array<i64: 1, 3, 32>}]} {
    %c0_i32 = arith.constant 0 : i32
    %0 = arith.cmpi eq, %arg1, %c0_i32 : i32
    %1 = arith.extui %0 : i1 to i32
    %c0_i32_0 = arith.constant 0 : i32
    %2 = arith.cmpi ne, %1, %c0_i32_0 : i32
    scf.if %2 {
      %cst_23 = arith.constant 0.000000e+00 : f32
      %43 = vector.broadcast %cst_23 : f32 to vector<1x3x32xf32>
      %c0_24 = arith.constant 0 : index
      %c0_25 = arith.constant 0 : index
      %c0_26 = arith.constant 0 : index
      %44 = vector.load %arg8[%c0_24, %c0_25, %c0_26] : memref<1x3x32xf32, #tpu.memory_space<vmem>>, vector<1x3x32xf32>
      tpu.vector_store %arg8[%c0_24, %c0_25, %c0_26], %43 {strides = array<i32>} : memref<1x3x32xf32, #tpu.memory_space<vmem>>, vector<1x3x32xf32>,
    } else {
    }
    %c0 = arith.constant 0 : index
    %c0_1 = arith.constant 0 : index
    %3 = vector.load %arg2[%c0, %c0_1] : memref<128x8xf32, #tpu.memory_space<vmem>>, vector<128x8xf32>
    %4 = arith.truncf %3 : vector<128x8xf32> to vector<128x8xbf16>
    %c0_2 = arith.constant 0 : index
    %c0_3 = arith.constant 0 : index
    %5 = vector.load %arg4[%c0_2, %c0_3] : memref<8x32xbf16, #tpu.memory_space<vmem>>, vector<8x32xbf16>
    %cst = arith.constant dense<0.000000e+00> : vector<128x32xf32>
    %6 = tpu.matmul %4, %5, %cst {dimension_numbers = #tpu.dot_dimension_numbers<[1], [0], [0], [1], [0, 0, 1, 1], [], []>} : vector<128x8xbf16>, vector<8x32xbf16>, vector<128x32xf32> -> vector<128x32xf32>
    %c0_4 = arith.constant 0 : index
    %c0_5 = arith.constant 0 : index
    %7 = vector.load %arg5[%c0_4, %c0_5] : memref<1x32xf32, #tpu.memory_space<vmem>>, vector<1x32xf32>
    %8 = vector.broadcast %7 : vector<1x32xf32> to vector<128x32xf32>
    %9 = arith.addf %6, %8 : vector<128x32xf32>
    %cst_6 = arith.constant 0.000000e+00 : f32
    %10 = vector.broadcast %cst_6 : f32 to vector<128x32xf32>
    %11 = arith.maximumf %9, %10 : vector<128x32xf32>
    %12 = arith.truncf %11 : vector<128x32xf32> to vector<128x32xbf16>
    %c0_7 = arith.constant 0 : index
    %c0_8 = arith.constant 0 : index
    %13 = vector.load %arg6[%c0_7, %c0_8] : memref<32x32xbf16, #tpu.memory_space<vmem>>, vector<32x32xbf16>
    %cst_9 = arith.constant dense<0.000000e+00> : vector<128x32xf32>
    %14 = tpu.matmul %12, %13, %cst_9 {dimension_numbers = #tpu.dot_dimension_numbers<[1], [0], [0], [1], [0, 0, 1, 1], [], []>} : vector<128x32xbf16>, vector<32x32xbf16>, vector<128x32xf32> -> vector<128x32xf32>
    %c0_10 = arith.constant 0 : index
    %c0_11 = arith.constant 0 : index
    %15 = vector.load %arg7[%c0_10, %c0_11] : memref<1x32xf32, #tpu.memory_space<vmem>>, vector<1x32xf32>
    %16 = vector.broadcast %15 : vector<1x32xf32> to vector<128x32xf32>
    %17 = arith.addf %14, %16 : vector<128x32xf32>
    %cst_12 = arith.constant 0.000000e+00 : f32
    %18 = vector.broadcast %cst_12 : f32 to vector<128x32xf32>
    %19 = arith.maximumf %17, %18 : vector<128x32xf32>
    %c4_i32 = arith.constant 4 : i32
    %20 = arith.muli %arg0, %c4_i32 : i32
    %21 = arith.addi %20, %arg1 : i32
    %c128_i32 = arith.constant 128 : i32
    %22 = arith.muli %21, %c128_i32 : i32
    %23 = tpu.iota {dimensions = array<i32: 0>} : vector<128x1xi32>
    %24 = vector.broadcast %22 : i32 to vector<128x1xi32>
    %25 = arith.addi %24, %23 : vector<128x1xi32>
    %c1000_i32 = arith.constant 1000 : i32
    %26 = vector.broadcast %c1000_i32 : i32 to vector<128x1xi32>
    %27 = arith.cmpi slt, %25, %26 : vector<128x1xi32>
    %cst_13 = arith.constant 0.000000e+00 : f32
    %28 = vector.shape_cast %27 : vector<128x1xi1> to vector<128x1xi1>
    %29 = vector.broadcast %28 : vector<128x1xi1> to vector<128x32xi1>
    %30 = vector.broadcast %cst_13 : f32 to vector<128x32xf32>
    %31 = arith.select %29, %19, %30 : vector<128x32xi1>, vector<128x32xf32>
    %c0_14 = arith.constant 0 : index
    %c0_15 = arith.constant 0 : index
    %32 = vector.load %arg3[%c0_14, %c0_15] : memref<1x128xi32, #tpu.memory_space<vmem>>, vector<1x128xi32>
    %33 = tpu.iota {dimensions = array<i32: 0>} : vector<3x128xi32>
    %34 = vector.broadcast %32 : vector<1x128xi32> to vector<3x128xi32>
    %35 = arith.cmpi eq, %33, %34 : vector<3x128xi32>
    %36 = arith.extui %35 : vector<3x128xi1> to vector<3x128xi32>
    %37 = arith.sitofp %36 : vector<3x128xi32> to vector<3x128xf32>
    %c0_16 = arith.constant 0 : index
    %c0_17 = arith.constant 0 : index
    %c0_18 = arith.constant 0 : index
    %38 = vector.load %arg8[%c0_16, %c0_17, %c0_18] : memref<1x3x32xf32, #tpu.memory_space<vmem>>, vector<1x3x32xf32>
    %cst_19 = arith.constant dense<0.000000e+00> : vector<3x32xf32>
    %39 = tpu.matmul %37, %31, %cst_19 {dimension_numbers = #tpu.dot_dimension_numbers<[1], [0], [0], [1], [0, 0, 1, 1], [], []>} : vector<3x128xf32>, vector<128x32xf32>, vector<3x32xf32> -> vector<3x32xf32>
    %40 = vector.shape_cast %39 : vector<3x32xf32> to vector<1x3x32xf32>
    %41 = arith.addf %38, %40 : vector<1x3x32xf32>
    %c0_20 = arith.constant 0 : index
    %c0_21 = arith.constant 0 : index
    %c0_22 = arith.constant 0 : index
    %42 = vector.load %arg8[%c0_20, %c0_21, %c0_22] : memref<1x3x32xf32, #tpu.memory_space<vmem>>, vector<1x3x32xf32>
    tpu.vector_store %arg8[%c0_20, %c0_21, %c0_22], %41 {strides = array<i32>} : memref<1x3x32xf32, #tpu.memory_space<vmem>>, vector<1x3x32xf32>,
    return
  }
  func.func @transform_0(%arg0: i32, %arg1: i32) -> (i32, i32) {
    %c4_i32 = arith.constant 4 : i32
    %0 = arith.muli %arg0, %c4_i32 : i32
    %1 = arith.addi %0, %arg1 : i32
    %c7_i32 = arith.constant 7 : i32
    %2 = arith.minsi %1, %c7_i32 : i32
    %c0_i32 = arith.constant 0 : i32
    %c0_i32_0 = arith.constant 0 : i32
    return %2, %c0_i32 : i32, i32
  }
  func.func @transform_1(%arg0: i32, %arg1: i32) -> (i32, i32) {
    %c4_i32 = arith.constant 4 : i32
    %0 = arith.muli %arg0, %c4_i32 : i32
    %1 = arith.addi %0, %arg1 : i32
    %c7_i32 = arith.constant 7 : i32
    %2 = arith.minsi %1, %c7_i32 : i32
    %c0_i32 = arith.constant 0 : i32
    %c0_i32_0 = arith.constant 0 : i32
    return %c0_i32, %2 : i32, i32
  }
  func.func @transform_2(%arg0: i32, %arg1: i32) -> (i32, i32) {
    %c0_i32 = arith.constant 0 : i32
    %c0_i32_0 = arith.constant 0 : i32
    %c0_i32_1 = arith.constant 0 : i32
    return %c0_i32, %c0_i32_0 : i32, i32
  }
  func.func @transform_3(%arg0: i32, %arg1: i32) -> (i32, i32) {
    %c0_i32 = arith.constant 0 : i32
    %c0_i32_0 = arith.constant 0 : i32
    %c0_i32_1 = arith.constant 0 : i32
    return %c0_i32, %c0_i32_0 : i32, i32
  }
  func.func @transform_4(%arg0: i32, %arg1: i32) -> (i32, i32) {
    %c0_i32 = arith.constant 0 : i32
    %c0_i32_0 = arith.constant 0 : i32
    %c0_i32_1 = arith.constant 0 : i32
    return %c0_i32, %c0_i32_0 : i32, i32
  }
  func.func @transform_5(%arg0: i32, %arg1: i32) -> (i32, i32) {
    %c0_i32 = arith.constant 0 : i32
    %c0_i32_0 = arith.constant 0 : i32
    %c0_i32_1 = arith.constant 0 : i32
    return %c0_i32, %c0_i32_0 : i32, i32
  }
  func.func @transform_6(%arg0: i32, %arg1: i32) -> (i32, i32, i32) {
    %c0_i32 = arith.constant 0 : i32
    %c0_i32_0 = arith.constant 0 : i32
    %c0_i32_1 = arith.constant 0 : i32
    return %arg0, %c0_i32, %c0_i32_0 : i32, i32, i32
  }
}

</mosaic_0001>

<llo_original>
// kernel: _lambda_.1
$region0: #{_lambda_.1}
  #allocation0 [shape = 'u32[]', space=smem, size = 0x4, offset = 0x4, fixed_abs, tag = 'smem constant byte address 0x4 - core index']
  #allocation1 [shape = 'u32[144,128]{1,0:T(1,128)}', space=vmem, size = 0x12000, scoped, tag = 'internal scratch']
  %s0 = inlined_call_operand.vmem [shape: f32[1000,8], index: 0, kind: input, shape index: {}]
  %s1 = inlined_call_operand.vmem [shape: s32[1,1000], index: 1, kind: input, shape index: {}]
  %s2 = inlined_call_operand.vmem [shape: bf16[8,32], index: 2, kind: input, shape index: {}]
  %s3 = inlined_call_operand.vmem [shape: f32[1,32], index: 3, kind: input, shape index: {}, may-alias: {3,5}]
  %s4 = inlined_call_operand.vmem [shape: bf16[32,32], index: 4, kind: input, shape index: {}]
  %s5 = inlined_call_operand.vmem [shape: f32[1,32], index: 5, kind: input, shape index: {}, may-alias: {3,5}]
  %s6 = inlined_call_operand.vmem [shape: f32[2,3,32], index: 6, kind: output, shape index: {}]
  %s7 = sld [smem:[#allocation0]]
  $region61: #{_lambda_.1} parent=0
    _
  %s9 = ssub.s32 1, %s7
  %s10 = scalar_select 0, %s9, %s7
  loop: start=0, step=1, limit=10
  $region2: #{_lambda_.1} parent=0 // loop_pre_header
    _
  $region3: #{_lambda_.1} parent=0 // loop_header
    %s12 = sphi 0, %s16
    %p13 = scmp.ge.s32.totalorder %s12, 10
    %s19 = sphi 0, %s31
    %s20 = sphi 0, %s27
    %s21 = sphi 0, %s19
    %s22 = sphi 0, %s20
    %s23 = sphi 0, %s21
    %s24 = sphi 0, %s22
    %s42 = sphi 0, %s44
    %s45 = sphi 0, %s42
    %s46 = sphi 0, %s45
    %s62 = sphi 0, %s46
    %s76 = sphi 0, %s78
    %s79 = sphi 0, %s76
    %s80 = sphi 0, %s79
    %s96 = sphi 0, %s80
    %s100 = sphi 0, %s100
    %s102 = sphi 0, %s100
    %s103 = sphi 0, %s102
    %s117 = sphi 0, %s103
    %s121 = sphi 0, %s121
    %s123 = sphi 0, %s121
    %s124 = sphi 0, %s123
    %s138 = sphi 0, %s124
    %s142 = sphi 0, %s142
    %s144 = sphi 0, %s142
    %s145 = sphi 0, %s144
    %s159 = sphi 0, %s145
    %s163 = sphi 0, %s163
    %s165 = sphi 0, %s163
    %s166 = sphi 0, %s165
    %s180 = sphi 0, %s166
    %s186 = sphi 0, %s188
    %s189 = sphi 0, %s186
    %s190 = sphi 0, %s189
    %s206 = sphi 0, %s190
  $region4: #{_lambda_.1} parent=0 // loop_header_branch
    %15 = sbr.rel (%p13) target = $region8
  $region5: #{_lambda_.1} parent=0 // loop_body
    %s17 = ssub.s32 %s12, 1
    %s18 = ssub.s32 %s12, 2
    %s25 = sadd.s32 1, %s20
    %p26 = scmp.ge.s32.totalorder %s25, 4
    %s27 = scalar_select %p26, 0, %s25
    %s28 = sadd.s32 1, %s19
    %s29 = scalar_select %p26, %s28, %s19
    %p30 = scmp.ge.s32.totalorder %s29, 2
    %s31 = scalar_select %p30, 0, %s29
    %s32 = smul.u32 %s19, 4
    %s33 = sadd.s32 %s32, %s20
    %p34 = scmp.lt.s32.totalorder %s33, 7
    %s35 = scalar_select %p34, %s33, 7
    %s36 = smul.u32 %s31, 4
    %s37 = sadd.s32 %s36, %s27
    %p38 = scmp.lt.s32.totalorder %s37, 7
    %s39 = scalar_select %p38, %s37, 7
    %s40 = ssub.s32 %s35, %s39
    %p41 = scmp.eq.s32.totalorder %s40, 0
    %s43 = sadd.s32 %s42, 1
    %s44 = scalar_select %p41, %s42, %s43
    %p47 = pneg %p41
    %p48 = scmp.eq.s32.totalorder %s12, 7
    %p49 = por %p47, %p48
    %p50 = scmp.ne.s32.totalorder %s42, %s45
    %p51 = scmp.eq.s32.totalorder %s12, 0
    %p52 = por %p50, %p51
    %p53 = scmp.ne.s32.totalorder %s42, %s45
    %p54 = scmp.eq.s32.totalorder %s17, 7
    %p55 = por %p53, %p54
    %p56 = scmp.ne.s32.totalorder %s45, %s46
    %p57 = scmp.eq.s32.totalorder %s17, 0
    %p58 = por %p56, %p57
    %p59 = scmp.ne.s32.totalorder %s45, %s46
    %p60 = scmp.eq.s32.totalorder %s18, 7
    %p61 = por %p59, %p60
    %p63 = scmp.ne.s32.totalorder %s46, %s62
    %p64 = scmp.eq.s32.totalorder %s18, 0
    %p65 = por %p63, %p64
    %s66 = smul.u32 %s19, 4
    %s67 = sadd.s32 %s66, %s20
    %p68 = scmp.lt.s32.totalorder %s67, 7
    %s69 = scalar_select %p68, %s67, 7
    %s70 = smul.u32 %s31, 4
    %s71 = sadd.s32 %s70, %s27
    %p72 = scmp.lt.s32.totalorder %s71, 7
    %s73 = scalar_select %p72, %s71, 7
    %s74 = ssub.s32 %s69, %s73
    %p75 = scmp.eq.s32.totalorder %s74, 0
    %s77 = sadd.s32 %s76, 1
    %s78 = scalar_select %p75, %s76, %s77
    %p81 = pneg %p75
    %p82 = scmp.eq.s32.totalorder %s12, 7
    %p83 = por %p81, %p82
    %p84 = scmp.ne.s32.totalorder %s76, %s79
    %p85 = scmp.eq.s32.totalorder %s12, 0
    %p86 = por %p84, %p85
    %p87 = scmp.ne.s32.totalorder %s76, %s79
    %p88 = scmp.eq.s32.totalorder %s17, 7
    %p89 = por %p87, %p88
    %p90 = scmp.ne.s32.totalorder %s79, %s80
    %p91 = scmp.eq.s32.totalorder %s17, 0
    %p92 = por %p90, %p91
    %p93 = scmp.ne.s32.totalorder %s79, %s80
    %p94 = scmp.eq.s32.totalorder %s18, 7
    %p95 = por %p93, %p94
    %p97 = scmp.ne.s32.totalorder %s80, %s96
    %p98 = scmp.eq.s32.totalorder %s18, 0
    %p99 = por %p97, %p98
    %s101 = sadd.s32 %s100, 1
    %p104 = scmp.eq.s32.totalorder %s12, 7
    %p105 = scmp.ne.s32.totalorder %s100, %s102
    %p106 = scmp.eq.s32.totalorder %s12, 0
    %p107 = por %p105, %p106
    %p108 = scmp.ne.s32.totalorder %s100, %s102
    %p109 = scmp.eq.s32.totalorder %s17, 7
    %p110 = por %p108, %p109
    %p111 = scmp.ne.s32.totalorder %s102, %s103
    %p112 = scmp.eq.s32.totalorder %s17, 0
    %p113 = por %p111, %p112
    %p114 = scmp.ne.s32.totalorder %s102, %s103
    %p115 = scmp.eq.s32.totalorder %s18, 7
    %p116 = por %p114, %p115
    %p118 = scmp.ne.s32.totalorder %s103, %s117
    %p119 = scmp.eq.s32.totalorder %s18, 0
    %p120 = por %p118, %p119
    %s122 = sadd.s32 %s121, 1
    %p125 = scmp.eq.s32.totalorder %s12, 7
    %p126 = scmp.ne.s32.totalorder %s121, %s123
    %p127 = scmp.eq.s32.totalorder %s12, 0
    %p128 = por %p126, %p127
    %p129 = scmp.ne.s32.totalorder %s121, %s123
    %p130 = scmp.eq.s32.totalorder %s17, 7
    %p131 = por %p129, %p130
    %p132 = scmp.ne.s32.totalorder %s123, %s124
    %p133 = scmp.eq.s32.totalorder %s17, 0
    %p134 = por %p132, %p133
    %p135 = scmp.ne.s32.totalorder %s123, %s124
    %p136 = scmp.eq.s32.totalorder %s18, 7
    %p137 = por %p135, %p136
    %p139 = scmp.ne.s32.totalorder %s124, %s138
    %p140 = scmp.eq.s32.totalorder %s18, 0
    %p141 = por %p139, %p140
    %s143 = sadd.s32 %s142, 1
    %p146 = scmp.eq.s32.totalorder %s12, 7
    %p147 = scmp.ne.s32.totalorder %s142, %s144
    %p148 = scmp.eq.s32.totalorder %s12, 0
    %p149 = por %p147, %p148
    %p150 = scmp.ne.s32.totalorder %s142, %s144
    %p151 = scmp.eq.s32.totalorder %s17, 7
    %p152 = por %p150, %p151
    %p153 = scmp.ne.s32.totalorder %s144, %s145
    %p154 = scmp.eq.s32.totalorder %s17, 0
    %p155 = por %p153, %p154
    %p156 = scmp.ne.s32.totalorder %s144, %s145
    %p157 = scmp.eq.s32.totalorder %s18, 7
    %p158 = por %p156, %p157
    %p160 = scmp.ne.s32.totalorder %s145, %s159
    %p161 = scmp.eq.s32.totalorder %s18, 0
    %p162 = por %p160, %p161
    %s164 = sadd.s32 %s163, 1
    %p167 = scmp.eq.s32.totalorder %s12, 7
    %p168 = scmp.ne.s32.totalorder %s163, %s165
    %p169 = scmp.eq.s32.totalorder %s12, 0
    %p170 = por %p168, %p169
    %p171 = scmp.ne.s32.totalorder %s163, %s165
    %p172 = scmp.eq.s32.totalorder %s17, 7
    %p173 = por %p171, %p172
    %p174 = scmp.ne.s32.totalorder %s165, %s166
    %p175 = scmp.eq.s32.totalorder %s17, 0
    %p176 = por %p174, %p175
    %p177 = scmp.ne.s32.totalorder %s165, %s166
    %p178 = scmp.eq.s32.totalorder %s18, 7
    %p179 = por %p177, %p178
    %p181 = scmp.ne.s32.totalorder %s166, %s180
    %p182 = scmp.eq.s32.totalorder %s18, 0
    %p183 = por %p181, %p182
    %s184 = ssub.s32 %s19, %s31
    %p185 = scmp.eq.s32.totalorder %s184, 0
    %s187 = sadd.s32 %s186, 1
    %s188 = scalar_select %p185, %s186, %s187
    %p191 = pneg %p185
    %p192 = scmp.eq.s32.totalorder %s12, 7
    %p193 = por %p191, %p192
    %p194 = scmp.ne.s32.totalorder %s186, %s189
    %p195 = scmp.eq.s32.totalorder %s12, 0
    %p196 = por %p194, %p195
    %p197 = scmp.ne.s32.totalorder %s186, %s189
    %p198 = scmp.eq.s32.totalorder %s17, 7
    %p199 = por %p197, %p198
    %p200 = scmp.ne.s32.totalorder %s189, %s190
    %p201 = scmp.eq.s32.totalorder %s17, 0
    %p202 = por %p200, %p201
    %p203 = scmp.ne.s32.totalorder %s189, %s190
    %p204 = scmp.eq.s32.totalorder %s18, 7
    %p205 = por %p203, %p204
    %p207 = scmp.ne.s32.totalorder %s190, %s206
    %p208 = scmp.eq.s32.totalorder %s18, 0
    %p209 = por %p207, %p208
    %p210 = scmp.le.s32.totalorder 1, %s12
    %p211 = scmp.lt.s32.totalorder %s12, 9
    %p212 = pnand %p210, %p211
    %p213 = pneg %p212
    // Predicated region
    $region9: #{_lambda_.1} parent=5 // pred_check
      _
    $region10: #{_lambda_.1} parent=5 // pred_check_branch
      %215 = sbr.rel (%p212) target = $region12
    $region11: #{_lambda_.1} parent=5 // pred_region
      %s216 = ssub.s32 %s12, 1
      // Predicated region
      $region13: #{_lambda_.1} parent=11 // pred_check
        %p217 = pneg %p113
      $region14: #{_lambda_.1} parent=11 // pred_check_branch
        %219 = sbr.rel (%p217) target = $region16
      $region15: #{_lambda_.1} parent=11 // pred_region
        _
      $region16: #{_lambda_.1} parent=11 // pred_fallthru
        _
      // Predicated region
      $region17: #{_lambda_.1} parent=11 // pred_check
        %p220 = pneg %p134
      $region18: #{_lambda_.1} parent=11 // pred_check_branch
        %222 = sbr.rel (%p220) target = $region20
      $region19: #{_lambda_.1} parent=11 // pred_region
        _
      $region20: #{_lambda_.1} parent=11 // pred_fallthru
        _
      // Predicated region
      $region21: #{_lambda_.1} parent=11 // pred_check
        %p223 = pneg %p155
      $region22: #{_lambda_.1} parent=11 // pred_check_branch
        %225 = sbr.rel (%p223) target = $region24
      $region23: #{_lambda_.1} parent=11 // pred_region
        _
      $region24: #{_lambda_.1} parent=11 // pred_fallthru
        _
      // Predicated region
      $region25: #{_lambda_.1} parent=11 // pred_check
        %p226 = pneg %p176
      $region26: #{_lambda_.1} parent=11 // pred_check_branch
        %228 = sbr.rel (%p226) target = $region28
      $region27: #{_lambda_.1} parent=11 // pred_region
        _
      $region28: #{_lambda_.1} parent=11 // pred_fallthru
        _
    $region12: #{_lambda_.1} parent=5 // pred_fallthru
      _
    %p229 = scmp.lt.s32.totalorder %s12, 8
    // Predicated region
    $region29: #{_lambda_.1} parent=5 // pred_check
      %p230 = pneg %p229
    $region30: #{_lambda_.1} parent=5 // pred_check_branch
      %232 = sbr.rel (%p230) target = $region32
    $region31: #{_lambda_.1} parent=5 // pred_region
      // Predicated region
      $region33: #{_lambda_.1} parent=31 // pred_check
        %p233 = pneg %p52
      $region34: #{_lambda_.1} parent=31 // pred_check_branch
        %235 = sbr.rel (%p233) target = $region36
      $region35: #{_lambda_.1} parent=31 // pred_region
        %s236 = smul.u32 %s19, 4
        %s237 = sadd.s32 %s236, %s20
        %p238 = scmp.lt.s32.totalorder %s237, 7
        %s239 = scalar_select %p238, %s237, 7
        %s240 = smul.u32 16, %s239
        %s241 = ssub.s32 125, %s240
        %p242 = scmp.lt.s32.totalorder %s241, 16
        %s243 = scalar_select %p242, %s241, 16
        %s244 = smul.u32 128, %s243
        %p245 = scmp.lt.s32.totalorder %s240, 124
        %s246 = scalar_select %p245, %s240, 124
        %s247 = smul.addr %s246, 8
        %s248 = scalar_lea.vmem %s0, %s247
        %s249 = smul.u32 %s19, 4
        %s250 = sadd.s32 %s249, %s20
        %p251 = scmp.lt.s32.totalorder %s250, 7
        %s252 = scalar_select %p251, %s250, 7
        %s253 = smul.u32 16, %s252
        %s254 = ssub.s32 125, %s253
        %p255 = scmp.lt.s32.totalorder %s254, 16
        %s256 = scalar_select %p255, %s254, 16
        %s257 = smul.u32 128, %s256
      $region36: #{_lambda_.1} parent=31 // pred_fallthru
        _
      // Predicated region
      $region37: #{_lambda_.1} parent=31 // pred_check
        %p258 = pneg %p86
      $region38: #{_lambda_.1} parent=31 // pred_check_branch
        %260 = sbr.rel (%p258) target = $region40
      $region39: #{_lambda_.1} parent=31 // pred_region
        %s261 = smul.u32 %s19, 4
        %s262 = sadd.s32 %s261, %s20
        %p263 = scmp.lt.s32.totalorder %s262, 7
        %s264 = scalar_select %p263, %s262, 7
        %p265 = scmp.lt.s32.totalorder %s264, 7
        %s266 = scalar_select %p265, %s264, 7
        %s267 = scalar_lea.vmem %s1, %s266
        %s268 = smul.u32 %s19, 4
        %s269 = sadd.s32 %s268, %s20
        %p270 = scmp.lt.s32.totalorder %s269, 7
        %s271 = scalar_select %p270, %s269, 7
      $region40: #{_lambda_.1} parent=31 // pred_fallthru
        _
    $region32: #{_lambda_.1} parent=5 // pred_fallthru
      _
    %p272 = scmp.le.s32.totalorder 1, %s12
    %p273 = scmp.lt.s32.totalorder %s12, 9
    %p274 = pnand %p272, %p273
    %p275 = pneg %p274
    // Predicated region
    $region41: #{_lambda_.1} parent=5 // pred_check
      _
    $region42: #{_lambda_.1} parent=5 // pred_check_branch
      %277 = sbr.rel (%p274) target = $region44
    $region43: #{_lambda_.1} parent=5 // pred_region
      %s278 = ssub.s32 %s12, 1
      %s279 = smul.u32 %s21, 4
      %s280 = sadd.s32 %s279, %s22
      %p281 = scmp.lt.s32.totalorder %s280, 7
      %s282 = scalar_select %p281, %s280, 7
      %s283 = smul.u32 16, %s282
      %s284 = ssub.s32 125, %s283
      %p285 = scmp.lt.s32.totalorder %s284, 16
      %s286 = scalar_select %p285, %s284, 16
      %s287 = smul.u32 128, %s286
      %p288 = scmp.lt.s32.totalorder %s283, 124
      %s289 = scalar_select %p288, %s283, 124
      %s290 = smul.addr %s289, 8
      %s291 = scalar_lea.vmem %s0, %s290
      %p292 = pneg %p58
      %p293 = pneg %p55
      %s294 = smul.u32 %s21, 4
      %s295 = sadd.s32 %s294, %s22
      %p296 = scmp.lt.s32.totalorder %s295, 7
      %s297 = scalar_select %p296, %s295, 7
      %p298 = scmp.lt.s32.totalorder %s297, 7
      %s299 = scalar_select %p298, %s297, 7
      %s300 = scalar_lea.vmem %s1, %s299
      %p301 = pneg %p92
      %p302 = pneg %p89
      %p303 = pneg %p113
      %p304 = pneg %p110
      %p305 = pneg %p134
      %p306 = pneg %p131
      %p307 = pneg %p155
      %p308 = pneg %p152
      %p309 = pneg %p176
      %p310 = pneg %p173
      %p311 = pneg %p202
      %p312 = pneg %p199
      %p313 = scmp.lt.s32.totalorder %s21, 1
      %s314 = scalar_select %p313, %s21, 1
      %s315 = smul.addr %s314, 4
      %s316 = scalar_lea.vmem %s6, %s315
      %s317 = smul.u32 %s21, 4
      %s318 = sadd.s32 %s317, %s22
      %p319 = scmp.lt.s32.totalorder %s318, 7
      %s320 = scalar_select %p319, %s318, 7
      %s321 = smul.u32 16, %s320
      %s322 = ssub.s32 125, %s321
      %p323 = scmp.lt.s32.totalorder %s322, 16
      %s324 = scalar_select %p323, %s322, 16
      %s325 = smul.u32 128, %s324
      %p326 = scmp.lt.s32.totalorder %s321, 124
      %s327 = scalar_select %p326, %s321, 124
      %s328 = smul.addr %s327, 8
      %s329 = scalar_lea.vmem %s0, %s328
      %s330 = smul.u32 %s21, 4
      %s331 = sadd.s32 %s330, %s22
      %p332 = scmp.lt.s32.totalorder %s331, 7
      %s333 = scalar_select %p332, %s331, 7
      %s334 = smul.u32 16, %s333
      %s335 = ssub.s32 125, %s334
      %p336 = scmp.lt.s32.totalorder %s335, 16
      %s337 = scalar_select %p336, %s335, 16
      %s338 = smul.u32 128, %s337
      %s339 = smul.u32 %s21, 4
      %s340 = sadd.s32 %s339, %s22
      %p341 = scmp.lt.s32.totalorder %s340, 7
      %s342 = scalar_select %p341, %s340, 7
      %p343 = scmp.lt.s32.totalorder %s342, 7
      %s344 = scalar_select %p343, %s342, 7
      %s345 = scalar_lea.vmem %s1, %s344
      %s346 = smul.u32 %s21, 4
      %s347 = sadd.s32 %s346, %s22
      %p348 = scmp.lt.s32.totalorder %s347, 7
      %s349 = scalar_select %p348, %s347, 7
      %p350 = scmp.lt.s32.totalorder %s21, 1
      %s351 = scalar_select %p350, %s21, 1
      %s352 = smul.addr %s351, 4
      %s353 = scalar_lea.vmem %s6, %s352
      %p355 = scmp.eq.s32.totalorder %s22, 0
      // Predicated region
      $region45: #{_lambda_.1} parent=43 // pred_check
        %p356 = pneg %p355
      $region46: #{_lambda_.1} parent=43 // pred_check_branch
        %358 = sbr.rel (%p356) target = $region48
      $region47: #{_lambda_.1} parent=43 // pred_region
        %vm359 = vcmask 256000
        %360 = vst.msk [vmem:[%s353] sm:$0x7] %vm359, 0.0
      $region48: #{_lambda_.1} parent=43 // pred_fallthru
        _
      %v361 = vld [vmem:[%s329] sm:$0xff]
      %v362 = vld [vmem:[%s329 + $0x8] sm:$0xff]
      %v363 = vld [vmem:[%s329 + $0x10] sm:$0xff]
      %v364 = vld [vmem:[%s329 + $0x18] sm:$0xff]
      %v365 = vld [vmem:[%s329 + $0x20] sm:$0xff]
      %v366 = vld [vmem:[%s329 + $0x28] sm:$0xff]
      %v367 = vld [vmem:[%s329 + $0x30] sm:$0xff]
      %v368 = vld [vmem:[%s329 + $0x38] sm:$0xff]
      %v369 = vld [vmem:[%s329 + $0x40] sm:$0xff]
      %v370 = vld [vmem:[%s329 + $0x48] sm:$0xff]
      %v371 = vld [vmem:[%s329 + $0x50] sm:$0xff]
      %v372 = vld [vmem:[%s329 + $0x58] sm:$0xff]
      %v373 = vld [vmem:[%s329 + $0x60] sm:$0xff]
      %v374 = vld [vmem:[%s329 + $0x68] sm:$0xff]
      %v375 = vld [vmem:[%s329 + $0x70] sm:$0xff]
      %v376 = vld [vmem:[%s329 + $0x78] sm:$0xff]
      %v377 = vpack.c.bf16 %v362, %v361
      %v378 = vpack.c.bf16 %v364, %v363
      %v379 = vpack.c.bf16 %v366, %v365
      %v380 = vpack.c.bf16 %v368, %v367
      %v381 = vpack.c.bf16 %v370, %v369
      %v382 = vpack.c.bf16 %v372, %v371
      %v383 = vpack.c.bf16 %v374, %v373
      %v384 = vpack.c.bf16 %v376, %v375
      %v385 = vld [vmem:[%s2] sm:$0xf]
      %v386 = vld [vmem:[%s3] sm:$0x1]
      %v388 = vlaneseq
      %v389 = vshrl.u32 %v388, 7
      %v390 = vsub.s32 0, %v389
      %v391 = vrot.slane %v386, %v390
      %vm393 = vcmask 64512
      %v395 = vsel %vm393, %v377, 0
      %v398 = vsel %vm393, %v378, 0
      %v401 = vsel %vm393, %v379, 0
      %v404 = vsel %vm393, %v380, 0
      %v407 = vsel %vm393, %v381, 0
      %v410 = vsel %vm393, %v382, 0
      %v413 = vsel %vm393, %v383, 0
      %v416 = vsel %vm393, %v384, 0
      %vm418 = vcmask 1043456
      %v420 = vsel %vm418, %v385, 0
      %422 = vmatprep.subr.bf16.mxu0 0
      %423 = vmatpush1.bf16.msra.mxu0 0
      %424 = vmatprep.subr.bf16.mxu0 0
      %425 = vmatpush1.bf16.msra.mxu0 0
      %426 = vmatprep.subr.bf16.mxu0 0
      %427 = vmatpush1.bf16.msra.mxu0 0
      %428 = vmatprep.subr.bf16.mxu0 0
      %429 = vmatpush1.bf16.msra.mxu0 0
      %430 = vmatprep.subr.bf16.mxu0 0
      %431 = vmatpush1.bf16.msra.mxu0 0
      %432 = vmatprep.subr.bf16.mxu0 0
      %433 = vmatpush1.bf16.msra.mxu0 0
      %434 = vmatprep.subr.bf16.mxu0 0
      %435 = vmatpush1.bf16.msra.mxu0 0
      %436 = vmatprep.subr.bf16.mxu0 0
      %437 = vmatpush1.bf16.msra.mxu0 %v420
      %438 = vmatprep.subr.bf16.mxu0 0
      %439 = vmatpush2.bf16.msra.mxu0 0
      %440 = vmatprep.subr.bf16.mxu0 0
      %441 = vmatpush2.bf16.msra.mxu0 0
      %442 = vmatprep.subr.bf16.mxu0 0
      %443 = vmatpush2.bf16.msra.mxu0 0
      %444 = vmatprep.subr.bf16.mxu0 0
      %445 = vmatpush2.bf16.msra.mxu0 0
      %446 = vmatprep.subr.bf16.mxu0 0
      %447 = vmatpush2.bf16.msra.mxu0 0
      %448 = vmatprep.subr.bf16.mxu0 0
      %449 = vmatpush2.bf16.msra.mxu0 0
      %450 = vmatprep.subr.bf16.mxu0 0
      %451 = vmatpush2.bf16.msra.mxu0 0
      %452 = vmatprep.subr.bf16.mxu0 0
      %453 = vmatpush2.bf16.msra.mxu0 0
      %454 = vmatprep.mubr.bf16.mxu0 0
      %455 = vmatmul.mubr.bf16.gmra.mxu0 %v395
      %v456 = vpop.f32.mrf.mxu0
      %v457 = vadd.f32 %v391, %v456
      %v458 = vpop.f32.mrf.mxu0
      %v459 = vpop.f32.mrf.mxu0
      %v460 = vadd.f32 %v391, %v459
      %v461 = vpop.f32.mrf.mxu0
      %462 = vmatprep.mubr.bf16.mxu0 0
      %463 = vmatmul.mubr.bf16.gmra.mxu0 %v398
      %v464 = vpop.f32.mrf.mxu0
      %v465 = vadd.f32 %v391, %v464
      %v466 = vpop.f32.mrf.mxu0
      %v467 = vpop.f32.mrf.mxu0
      %v468 = vadd.f32 %v391, %v467
      %v469 = vpop.f32.mrf.mxu0
      %470 = vmatprep.mubr.bf16.mxu0 0
      %471 = vmatmul.mubr.bf16.gmra.mxu0 %v401
      %v472 = vpop.f32.mrf.mxu0
      %v473 = vadd.f32 %v391, %v472
      %v474 = vpop.f32.mrf.mxu0
      %v475 = vpop.f32.mrf.mxu0
      %v476 = vadd.f32 %v391, %v475
      %v477 = vpop.f32.mrf.mxu0
      %478 = vmatprep.mubr.bf16.mxu0 0
      %479 = vmatmul.mubr.bf16.gmra.mxu0 %v404
      %v480 = vpop.f32.mrf.mxu0
      %v481 = vadd.f32 %v391, %v480
      %v482 = vpop.f32.mrf.mxu0
      %v483 = vpop.f32.mrf.mxu0
      %v484 = vadd.f32 %v391, %v483
      %v485 = vpop.f32.mrf.mxu0
      %486 = vmatprep.mubr.bf16.mxu0 0
      %487 = vmatmul.mubr.bf16.gmra.mxu0 %v407
      %v488 = vpop.f32.mrf.mxu0
      %v489 = vadd.f32 %v391, %v488
      %v490 = vpop.f32.mrf.mxu0
      %v491 = vpop.f32.mrf.mxu0
      %v492 = vadd.f32 %v391, %v491
      %v493 = vpop.f32.mrf.mxu0
      %494 = vmatprep.mubr.bf16.mxu0 0
      %495 = vmatmul.mubr.bf16.gmra.mxu0 %v410
      %v496 = vpop.f32.mrf.mxu0
      %v497 = vadd.f32 %v391, %v496
      %v498 = vpop.f32.mrf.mxu0
      %v499 = vpop.f32.mrf.mxu0
      %v500 = vadd.f32 %v391, %v499
      %v501 = vpop.f32.mrf.mxu0
      %502 = vmatprep.mubr.bf16.mxu0 0
      %503 = vmatmul.mubr.bf16.gmra.mxu0 %v413
      %v504 = vpop.f32.mrf.mxu0
      %v505 = vadd.f32 %v391, %v504
      %v506 = vpop.f32.mrf.mxu0
      %v507 = vpop.f32.mrf.mxu0
      %v508 = vadd.f32 %v391, %v507
      %v509 = vpop.f32.mrf.mxu0
      %510 = vmatprep.mubr.bf16.mxu0 0
      %511 = vmatmul.mubr.bf16.gmra.mxu0 %v416
      %v512 = vpop.f32.mrf.mxu0
      %v513 = vadd.f32 %v391, %v512
      %v514 = vpop.f32.mrf.mxu0
      %v515 = vpop.f32.mrf.mxu0
      %v516 = vadd.f32 %v391, %v515
      %v517 = vpop.f32.mrf.mxu0
      %518 = vdwg.mxu0
      %v519 = vmax.f32 %v457, 0.0
      %v520 = vmax.f32 %v460, 0.0
      %v521 = vmax.f32 %v465, 0.0
      %v522 = vmax.f32 %v468, 0.0
      %v523 = vmax.f32 %v473, 0.0
      %v524 = vmax.f32 %v476, 0.0
      %v525 = vmax.f32 %v481, 0.0
      %v526 = vmax.f32 %v484, 0.0
      %v527 = vmax.f32 %v489, 0.0
      %v528 = vmax.f32 %v492, 0.0
      %v529 = vmax.f32 %v497, 0.0
      %v530 = vmax.f32 %v500, 0.0
      %v531 = vmax.f32 %v505, 0.0
      %v532 = vmax.f32 %v508, 0.0
      %v533 = vmax.f32 %v513, 0.0
      %v534 = vmax.f32 %v516, 0.0
      %v535 = vpack.c.bf16 %v520, %v519
      %v536 = vpack.c.bf16 %v522, %v521
      %v537 = vpack.c.bf16 %v524, %v523
      %v538 = vpack.c.bf16 %v526, %v525
      %v539 = vpack.c.bf16 %v528, %v527
      %v540 = vpack.c.bf16 %v530, %v529
      %v541 = vpack.c.bf16 %v532, %v531
      %v542 = vpack.c.bf16 %v534, %v533
      %v543 = vld [vmem:[%s4] sm:$0xf]
      %v544 = vld [vmem:[%s4 + $0x4] sm:$0xf]
      %v545 = vld [vmem:[%s4 + $0x8] sm:$0xf]
      %v546 = vld [vmem:[%s4 + $0xc] sm:$0xf]
      %v547 = vld [vmem:[%s5] sm:$0x1]
      %v549 = vlaneseq
      %v550 = vshrl.u32 %v549, 7
      %v551 = vsub.s32 0, %v550
      %v552 = vrot.slane %v547, %v551
      %v558 = vunpack.c.l.b16 %v543
      %v559 = vunpack.c.l.b16 %v544
      %v560 = vunpack.c.l.b16 %v545
      %v561 = vunpack.c.l.b16 %v546
      %v562 = vpack.c.b16 %v559, %v558
      %v563 = vpack.c.b16 %v561, %v560
      %vm566 = vcmask 261120
      %v568 = vsel %vm566, %v535, 0
      %v571 = vsel %vm566, %v536, 0
      %v574 = vsel %vm566, %v537, 0
      %v577 = vsel %vm566, %v538, 0
      %v580 = vsel %vm566, %v539, 0
      %v583 = vsel %vm566, %v540, 0
      %v586 = vsel %vm566, %v541, 0
      %v589 = vsel %vm566, %v542, 0
      %591 = vmatprep.subr.bf16.mxu0 0
      %592 = vmatpush1.bf16.msra.mxu0 0
      %593 = vmatprep.subr.bf16.mxu0 0
      %594 = vmatpush1.bf16.msra.mxu0 0
      %595 = vmatprep.subr.bf16.mxu0 0
      %596 = vmatpush1.bf16.msra.mxu0 0
      %597 = vmatprep.subr.bf16.mxu0 0
      %598 = vmatpush1.bf16.msra.mxu0 0
      %599 = vmatprep.subr.bf16.mxu0 0
      %600 = vmatpush1.bf16.msra.mxu0 0
      %601 = vmatprep.subr.bf16.mxu0 0
      %602 = vmatpush1.bf16.msra.mxu0 0
      %603 = vmatprep.subr.bf16.mxu0 0
      %604 = vmatpush1.bf16.msra.mxu0 %v563
      %605 = vmatprep.subr.bf16.mxu0 0
      %606 = vmatpush1.bf16.msra.mxu0 %v562
      %607 = vmatprep.subr.bf16.mxu0 0
      %608 = vmatpush2.bf16.msra.mxu0 0
      %609 = vmatprep.subr.bf16.mxu0 0
      %610 = vmatpush2.bf16.msra.mxu0 0
      %611 = vmatprep.subr.bf16.mxu0 0
      %612 = vmatpush2.bf16.msra.mxu0 0
      %613 = vmatprep.subr.bf16.mxu0 0
      %614 = vmatpush2.bf16.msra.mxu0 0
      %615 = vmatprep.subr.bf16.mxu0 0
      %616 = vmatpush2.bf16.msra.mxu0 0
      %617 = vmatprep.subr.bf16.mxu0 0
      %618 = vmatpush2.bf16.msra.mxu0 0
      %619 = vmatprep.subr.bf16.mxu0 0
      %620 = vmatpush2.bf16.msra.mxu0 0
      %621 = vmatprep.subr.bf16.mxu0 0
      %622 = vmatpush2.bf16.msra.mxu0 0
      %623 = vmatprep.mubr.bf16.mxu0 0
      %624 = vmatmul.mubr.bf16.gmra.mxu0 %v568
      %v625 = vpop.f32.mrf.mxu0
      %v626 = vadd.f32 %v552, %v625
      %v627 = vpop.f32.mrf.mxu0
      %v628 = vpop.f32.mrf.mxu0
      %v629 = vadd.f32 %v552, %v628
      %v630 = vpop.f32.mrf.mxu0
      %631 = vmatprep.mubr.bf16.mxu0 0
      %632 = vmatmul.mubr.bf16.gmra.mxu0 %v571
      %v633 = vpop.f32.mrf.mxu0
      %v634 = vadd.f32 %v552, %v633
      %v635 = vpop.f32.mrf.mxu0
      %v636 = vpop.f32.mrf.mxu0
      %v637 = vadd.f32 %v552, %v636
      %v638 = vpop.f32.mrf.mxu0
      %639 = vmatprep.mubr.bf16.mxu0 0
      %640 = vmatmul.mubr.bf16.gmra.mxu0 %v574
      %v641 = vpop.f32.mrf.mxu0
      %v642 = vadd.f32 %v552, %v641
      %v643 = vpop.f32.mrf.mxu0
      %v644 = vpop.f32.mrf.mxu0
      %v645 = vadd.f32 %v552, %v644
      %v646 = vpop.f32.mrf.mxu0
      %647 = vmatprep.mubr.bf16.mxu0 0
      %648 = vmatmul.mubr.bf16.gmra.mxu0 %v577
      %v649 = vpop.f32.mrf.mxu0
      %v650 = vadd.f32 %v552, %v649
      %v651 = vpop.f32.mrf.mxu0
      %v652 = vpop.f32.mrf.mxu0
      %v653 = vadd.f32 %v552, %v652
      %v654 = vpop.f32.mrf.mxu0
      %655 = vmatprep.mubr.bf16.mxu0 0
      %656 = vmatmul.mubr.bf16.gmra.mxu0 %v580
      %v657 = vpop.f32.mrf.mxu0
      %v658 = vadd.f32 %v552, %v657
      %v659 = vpop.f32.mrf.mxu0
      %v660 = vpop.f32.mrf.mxu0
      %v661 = vadd.f32 %v552, %v660
      %v662 = vpop.f32.mrf.mxu0
      %663 = vmatprep.mubr.bf16.mxu0 0
      %664 = vmatmul.mubr.bf16.gmra.mxu0 %v583
      %v665 = vpop.f32.mrf.mxu0
      %v666 = vadd.f32 %v552, %v665
      %v667 = vpop.f32.mrf.mxu0
      %v668 = vpop.f32.mrf.mxu0
      %v669 = vadd.f32 %v552, %v668
      %v670 = vpop.f32.mrf.mxu0
      %671 = vmatprep.mubr.bf16.mxu0 0
      %672 = vmatmul.mubr.bf16.gmra.mxu0 %v586
      %v673 = vpop.f32.mrf.mxu0
      %v674 = vadd.f32 %v552, %v673
      %v675 = vpop.f32.mrf.mxu0
      %v676 = vpop.f32.mrf.mxu0
      %v677 = vadd.f32 %v552, %v676
      %v678 = vpop.f32.mrf.mxu0
      %679 = vmatprep.mubr.bf16.mxu0 0
      %680 = vmatmul.mubr.bf16.gmra.mxu0 %v589
      %v681 = vpop.f32.mrf.mxu0
      %v682 = vadd.f32 %v552, %v681
      %v683 = vpop.f32.mrf.mxu0
      %v684 = vpop.f32.mrf.mxu0
      %v685 = vadd.f32 %v552, %v684
      %v686 = vpop.f32.mrf.mxu0
      %687 = vdwg.mxu0
      %v688 = vmax.f32 %v626, 0.0
      %v689 = vmax.f32 %v629, 0.0
      %v690 = vmax.f32 %v634, 0.0
      %v691 = vmax.f32 %v637, 0.0
      %v692 = vmax.f32 %v642, 0.0
      %v693 = vmax.f32 %v645, 0.0
      %v694 = vmax.f32 %v650, 0.0
      %v695 = vmax.f32 %v653, 0.0
      %v696 = vmax.f32 %v658, 0.0
      %v697 = vmax.f32 %v661, 0.0
      %v698 = vmax.f32 %v666, 0.0
      %v699 = vmax.f32 %v669, 0.0
      %v700 = vmax.f32 %v674, 0.0
      %v701 = vmax.f32 %v677, 0.0
      %v702 = vmax.f32 %v682, 0.0
      %v703 = vmax.f32 %v685, 0.0
      %s704 = smul.u32 %s21, 4
      %s705 = sadd.s32 %s704, %s22
      %s706 = smul.u32 %s705, 128
      %v707 = vlaneseq
      %v708 = vshrl.u32 %v707, 7
      %v709 = vadd.s32 %v708, 8
      %v710 = vadd.s32 %v708, 16
      %v711 = vadd.s32 %v708, 24
      %v712 = vadd.s32 %v708, 32
      %v713 = vadd.s32 %v708, 40
      %v714 = vadd.s32 %v708, 48
      %v715 = vadd.s32 %v708, 56
      %v716 = vadd.s32 %v708, 64
      %v717 = vadd.s32 %v708, 72
      %v718 = vadd.s32 %v708, 80
      %v719 = vadd.s32 %v708, 88
      %v720 = vadd.s32 %v708, 96
      %v721 = vadd.s32 %v708, 104
      %v722 = vadd.s32 %v708, 112
      %v723 = vadd.s32 %v708, 120
      %v724 = vstv %s706
      %v725 = vadd.s32 %v724, %v708
      %v726 = vadd.s32 %v724, %v709
      %v727 = vadd.s32 %v724, %v710
      %v728 = vadd.s32 %v724, %v711
      %v729 = vadd.s32 %v724, %v712
      %v730 = vadd.s32 %v724, %v713
      %v731 = vadd.s32 %v724, %v714
      %v732 = vadd.s32 %v724, %v715
      %v733 = vadd.s32 %v724, %v716
      %v734 = vadd.s32 %v724, %v717
      %v735 = vadd.s32 %v724, %v718
      %v736 = vadd.s32 %v724, %v719
      %v737 = vadd.s32 %v724, %v720
      %v738 = vadd.s32 %v724, %v721
      %v739 = vadd.s32 %v724, %v722
      %v740 = vadd.s32 %v724, %v723
      %vm741 = vcmp.lt.s32.totalorder %v725, 1000
      %vm742 = vcmp.lt.s32.totalorder %v726, 1000
      %vm743 = vcmp.lt.s32.totalorder %v727, 1000
      %vm744 = vcmp.lt.s32.totalorder %v728, 1000
      %vm745 = vcmp.lt.s32.totalorder %v729, 1000
      %vm746 = vcmp.lt.s32.totalorder %v730, 1000
      %vm747 = vcmp.lt.s32.totalorder %v731, 1000
      %vm748 = vcmp.lt.s32.totalorder %v732, 1000
      %vm749 = vcmp.lt.s32.totalorder %v733, 1000
      %vm750 = vcmp.lt.s32.totalorder %v734, 1000
      %vm751 = vcmp.lt.s32.totalorder %v735, 1000
      %vm752 = vcmp.lt.s32.totalorder %v736, 1000
      %vm753 = vcmp.lt.s32.totalorder %v737, 1000
      %vm754 = vcmp.lt.s32.totalorder %v738, 1000
      %vm755 = vcmp.lt.s32.totalorder %v739, 1000
      %vm756 = vcmp.lt.s32.totalorder %v740, 1000
      %v757 = vsel %vm741, 1, 0
      %v758 = vsel %vm742, 1, 0
      %v759 = vsel %vm743, 1, 0
      %v760 = vsel %vm744, 1, 0
      %v761 = vsel %vm745, 1, 0
      %v762 = vsel %vm746, 1, 0
      %v763 = vsel %vm747, 1, 0
      %v764 = vsel %vm748, 1, 0
      %v765 = vsel %vm749, 1, 0
      %v766 = vsel %vm750, 1, 0
      %v767 = vsel %vm751, 1, 0
      %v768 = vsel %vm752, 1, 0
      %v769 = vsel %vm753, 1, 0
      %v770 = vsel %vm754, 1, 0
      %v771 = vsel %vm755, 1, 0
      %v772 = vsel %vm756, 1, 0
      %vm773 = vcmp.eq.s32.totalorder %v757, 1
      %vm774 = vcmp.eq.s32.totalorder %v758, 1
      %vm775 = vcmp.eq.s32.totalorder %v759, 1
      %vm776 = vcmp.eq.s32.totalorder %v760, 1
      %vm777 = vcmp.eq.s32.totalorder %v761, 1
      %vm778 = vcmp.eq.s32.totalorder %v762, 1
      %vm779 = vcmp.eq.s32.totalorder %v763, 1
      %vm780 = vcmp.eq.s32.totalorder %v764, 1
      %vm781 = vcmp.eq.s32.totalorder %v765, 1
      %vm782 = vcmp.eq.s32.totalorder %v766, 1
      %vm783 = vcmp.eq.s32.totalorder %v767, 1
      %vm784 = vcmp.eq.s32.totalorder %v768, 1
      %vm785 = vcmp.eq.s32.totalorder %v769, 1
      %vm786 = vcmp.eq.s32.totalorder %v770, 1
      %vm787 = vcmp.eq.s32.totalorder %v771, 1
      %vm788 = vcmp.eq.s32.totalorder %v772, 1
      %v789 = vsel %vm773, %v688, 0.0
      %v790 = vsel %vm774, %v689, 0.0
      %v791 = vsel %vm775, %v690, 0.0
      %v792 = vsel %vm776, %v691, 0.0
      %v793 = vsel %vm777, %v692, 0.0
      %v794 = vsel %vm778, %v693, 0.0
      %v795 = vsel %vm779, %v694, 0.0
      %v796 = vsel %vm780, %v695, 0.0
      %v797 = vsel %vm781, %v696, 0.0
      %v798 = vsel %vm782, %v697, 0.0
      %v799 = vsel %vm783, %v698, 0.0
      %v800 = vsel %vm784, %v699, 0.0
      %v801 = vsel %vm785, %v700, 0.0
      %v802 = vsel %vm786, %v701, 0.0
      %v803 = vsel %vm787, %v702, 0.0
      %v804 = vsel %vm788, %v703, 0.0
      %v805 = vld [vmem:[%s345] sm:$0x1]
      %v806 = vlaneseq
      %v807 = vshrl.u32 %v806, 7
      %v808 = vsub.s32 0, %v807
      %v809 = vrot.slane %v805, %v808
      %vm810 = vcmp.eq.s32.totalorder %v708, %v809
      %v811 = vsel %vm810, 1, 0
      %v812 = vcvt.s32.f32 %v811
      %v813 = vld [vmem:[%s353] sm:$0x7]
      %814 = vmatprep.subr.mxu0 0.0
      %815 = vmatpush1.msra.mxu0 %v804
      %816 = vmatprep.subr.mxu0 0.0
      %817 = vmatpush1.msra.mxu0 %v803
      %818 = vmatprep.subr.mxu0 0.0
      %819 = vmatpush1.msra.mxu0 %v802
      %820 = vmatprep.subr.mxu0 0.0
      %821 = vmatpush1.msra.mxu0 %v801
      %822 = vmatprep.subr.mxu0 0.0
      %823 = vmatpush1.msra.mxu0 %v800
      %824 = vmatprep.subr.mxu0 0.0
      %825 = vmatpush1.msra.mxu0 %v799
      %826 = vmatprep.subr.mxu0 0.0
      %827 = vmatpush1.msra.mxu0 %v798
      %828 = vmatprep.subr.mxu0 0.0
      %829 = vmatpush1.msra.mxu0 %v797
      %830 = vmatprep.subr.mxu0 0.0
      %831 = vmatpush1.msra.mxu0 %v796
      %832 = vmatprep.subr.mxu0 0.0
      %833 = vmatpush1.msra.mxu0 %v795
      %834 = vmatprep.subr.mxu0 0.0
      %835 = vmatpush1.msra.mxu0 %v794
      %836 = vmatprep.subr.mxu0 0.0
      %837 = vmatpush1.msra.mxu0 %v793
      %838 = vmatprep.subr.mxu0 0.0
      %839 = vmatpush1.msra.mxu0 %v792
      %840 = vmatprep.subr.mxu0 0.0
      %841 = vmatpush1.msra.mxu0 %v791
      %842 = vmatprep.subr.mxu0 0.0
      %843 = vmatpush1.msra.mxu0 %v790
      %844 = vmatprep.subr.mxu0 0.0
      %845 = vmatpush1.msra.mxu0 %v789
      %846 = vmatprep.subr.mxu0 0.0
      %847 = vmatpush2.msra.mxu0 0.0
      %848 = vmatprep.subr.mxu0 0.0
      %849 = vmatpush2.msra.mxu0 0.0
      %850 = vmatprep.subr.mxu0 0.0
      %851 = vmatpush2.msra.mxu0 0.0
      %852 = vmatprep.subr.mxu0 0.0
      %853 = vmatpush2.msra.mxu0 0.0
      %854 = vmatprep.subr.mxu0 0.0
      %855 = vmatpush2.msra.mxu0 0.0
      %856 = vmatprep.subr.mxu0 0.0
      %857 = vmatpush2.msra.mxu0 0.0
      %858 = vmatprep.subr.mxu0 0.0
      %859 = vmatpush2.msra.mxu0 0.0
      %860 = vmatprep.subr.mxu0 0.0
      %861 = vmatpush2.msra.mxu0 0.0
      %862 = vmatprep.subr.mxu0 0.0
      %863 = vmatpush2.msra.mxu0 0.0
      %864 = vmatprep.subr.mxu0 0.0
      %865 = vmatpush2.msra.mxu0 0.0
      %866 = vmatprep.subr.mxu0 0.0
      %867 = vmatpush2.msra.mxu0 0.0
      %868 = vmatprep.subr.mxu0 0.0
      %869 = vmatpush2.msra.mxu0 0.0
      %870 = vmatprep.subr.mxu0 0.0
      %871 = vmatpush2.msra.mxu0 0.0
      %872 = vmatprep.subr.mxu0 0.0
      %873 = vmatpush2.msra.mxu0 0.0
      %874 = vmatprep.subr.mxu0 0.0
      %875 = vmatpush2.msra.mxu0 0.0
      %876 = vmatprep.subr.mxu0 0.0
      %877 = vmatpush2.msra.mxu0 0.0
      %878 = vmatprep.mubr.f32.mxu0 0.0
      %879 = vmatmul.mubr.f32.gmra.mxu0 %v812
      %v880 = vpop.f32.mrf.mxu0
      %v881 = vadd.f32 0.0, %v880
      %v882 = vpop.f32.mrf.mxu0
      %883 = vdwg.mxu0
      %v884 = vadd.f32 %v813, %v881
      %vm885 = vcmask 256000
      %886 = vst.msk [vmem:[%s353] sm:$0x7] %vm885, %v884
      %p887 = scmp.lt.s32.totalorder %s21, 1
      %s888 = scalar_select %p887, %s21, 1
      %s889 = smul.addr %s888, 4
      %s890 = scalar_lea.vmem %s6, %s889
      // Predicated region
      $region49: #{_lambda_.1} parent=43 // pred_check
        %p891 = pneg %p199
      $region50: #{_lambda_.1} parent=43 // pred_check_branch
        %893 = sbr.rel (%p891) target = $region52
      $region51: #{_lambda_.1} parent=43 // pred_region
        _
      $region52: #{_lambda_.1} parent=43 // pred_fallthru
        _
    $region44: #{_lambda_.1} parent=5 // pred_fallthru
      _
    %p894 = scmp.le.s32.totalorder 2, %s12
    // Predicated region
    $region53: #{_lambda_.1} parent=5 // pred_check
      %p895 = pneg %p894
    $region54: #{_lambda_.1} parent=5 // pred_check_branch
      %897 = sbr.rel (%p895) target = $region56
    $region55: #{_lambda_.1} parent=5 // pred_region
      %s898 = ssub.s32 %s12, 2
      // Predicated region
      $region57: #{_lambda_.1} parent=55 // pred_check
        %p899 = pneg %p205
      $region58: #{_lambda_.1} parent=55 // pred_check_branch
        %901 = sbr.rel (%p899) target = $region60
      $region59: #{_lambda_.1} parent=55 // pred_region
        %p902 = scmp.lt.s32.totalorder %s23, 1
        %s903 = scalar_select %p902, %s23, 1
        %s904 = smul.addr %s903, 4
        %s905 = scalar_lea.vmem %s6, %s904
      $region60: #{_lambda_.1} parent=55 // pred_fallthru
        _
    $region56: #{_lambda_.1} parent=5 // pred_fallthru
      _
  $region6: #{_lambda_.1} parent=0 // loop_footer
    %s16 = sadd.s32 1, %s12
  $region7: #{_lambda_.1} parent=0 // loop_footer_branch
    %11 = sbr.rel target = $region3
  $region8: #{_lambda_.1} parent=0 // loop_exit
    _

</llo_original>
